<compile_context>
chip_gen: v5e
topology: v5e:2x2
jax: 0.10.0
libtpu: 0.0.40
codegen_flags: <defaults>
</compile_context>

<pallas_src>
import jax
import jax.numpy as jnp
from jax import lax
from jax.experimental import pallas as pl
from jax.experimental.pallas import tpu as pltpu  # noqa: F401  (TPU backend)

BN_EPS = 1e-5


def mlp_kernel(x_ref, w1_ref, gamma_ref, beta_ref, w2_ref, o_ref):
    # x:    (N, H)   row-major activations
    # w1:   (M, H)   PyTorch nn.Linear layout (out_features, in_features)
    # gamma/beta/w2: (1, M) rows
    x = x_ref[...]
    w1 = w1_ref[...]

    # linear1: contract the shared H axis directly (no pre-transpose needed)
    h = lax.dot_general(
        x, w1,
        dimension_numbers=(((1,), (1,)), ((), ())),
        preferred_element_type=jnp.float32,
    )  # (N, M)

    # BatchNorm1d (training-mode batch stats) folded into one scale/shift.
    # Independent sublane reductions: sum(h) and sum(h*h) can issue back-to-back.
    n = h.shape[0]
    inv_n = 1.0 / n
    s1 = jnp.sum(h, axis=0, keepdims=True)          # (1, M)
    s2 = jnp.sum(h * h, axis=0, keepdims=True)      # (1, M)
    mean = s1 * inv_n
    var = s2 * inv_n - mean * mean                  # biased variance
    inv_std = lax.rsqrt(var + BN_EPS)
    a = inv_std * gamma_ref[...]                    # (1, M) scale
    b = beta_ref[...] - mean * a                    # (1, M) shift
    hn = h * a + b                                  # single mul + add per element

    act = jnp.maximum(hn, 0.0)                      # ReLU

    # linear2: (N,M) x (M,1) done as VPU multiply + XLU lane reduction
    # instead of a 1-lane-wide MXU pass.
    o_ref[...] = jnp.sum(act * w2_ref[...], axis=-1, keepdims=True)  # (N, 1)


def mlp_forward(x, w1, gamma, beta, w2):
    """x: (N, hidden_dim); w1: (mid_dim, hidden_dim); w2: (1, mid_dim)."""
    n, hidden = x.shape
    mid = w1.shape[0]
    gamma2 = gamma.reshape(1, mid)
    beta2 = beta.reshape(1, mid)
    w2_row = w2.reshape(1, mid)

    full = lambda shape: pl.BlockSpec(shape, lambda: tuple(0 for _ in shape))
    return pl.pallas_call(
        mlp_kernel,
        out_shape=jax.ShapeDtypeStruct((n, 1), jnp.float32),
        grid=(),
        in_specs=[
            full((n, hidden)),   # x
            full((mid, hidden)), # w1 (PyTorch layout, no transpose)
            full((1, mid)),      # gamma
            full((1, mid)),      # beta
            full((1, mid)),      # w2 as a lane-dense row
        ],
        out_specs=full((n, 1)),
    )(x, w1, gamma2, beta2, w2_row)


if __name__ == "__main__":
    # Small shapes consistent with the module: batch=8, hidden_dim=32, mid_dim=128
    N, HIDDEN, MID = 8, 32, 128

    key = jax.random.PRNGKey(0)
    kx, kw1, kw2 = jax.random.split(key, 3)

    x = jax.random.normal(kx, (N, HIDDEN), dtype=jnp.float32)

    # Deterministic parameter init (Kaiming-uniform-like bounds, as in nn.Linear)
    b1 = 1.0 / jnp.sqrt(HIDDEN)
    w1 = jax.random.uniform(kw1, (MID, HIDDEN), minval=-b1, maxval=b1,
                            dtype=jnp.float32)
    b2 = 1.0 / jnp.sqrt(MID)
    w2 = jax.random.uniform(kw2, (1, MID), minval=-b2, maxval=b2,
                            dtype=jnp.float32)
    gamma = jnp.ones((MID,), dtype=jnp.float32)   # BatchNorm1d weight
    beta = jnp.zeros((MID,), dtype=jnp.float32)   # BatchNorm1d bias

    out = mlp_forward(x, w1, gamma, beta, w2)
    jax.block_until_ready(out)

    # Pure-JAX reference check (same semantics as the PyTorch module in train mode)
    h = x @ w1.T
    mean = h.mean(axis=0, keepdims=True)
    var = ((h - mean) ** 2).mean(axis=0, keepdims=True)
    hn = (h - mean) / jnp.sqrt(var + BN_EPS) * gamma + beta
    ref = jnp.maximum(hn, 0.0) @ w2.T
    assert out.shape == (N, 1)
    assert jnp.allclose(out, ref, atol=1e-4, rtol=1e-4)

    print("KERNEL_OK")
</pallas_src>

<mosaic_0001>
module attributes {stable_mosaic.version = 11 : i64} {
  func.func @mlp_kernel(%arg0: memref<8x32xf32, #tpu.memory_space<vmem>>, %arg1: memref<128x32xf32, #tpu.memory_space<vmem>>, %arg2: memref<1x128xf32, #tpu.memory_space<vmem>>, %arg3: memref<1x128xf32, #tpu.memory_space<vmem>>, %arg4: memref<1x128xf32, #tpu.memory_space<vmem>>, %arg5: memref<8x1xf32, #tpu.memory_space<vmem>>) attributes {dimension_semantics = [], scalar_prefetch = 0 : i64, scratch_operands = 0 : i64, tpu.core_type = #tpu.core_type<tc>} {
    %c0 = arith.constant 0 : index
    %c0_0 = arith.constant 0 : index
    %0 = vector.load %arg0[%c0, %c0_0] : memref<8x32xf32, #tpu.memory_space<vmem>>, vector<8x32xf32>
    %c0_1 = arith.constant 0 : index
    %c0_2 = arith.constant 0 : index
    %1 = vector.load %arg1[%c0_1, %c0_2] : memref<128x32xf32, #tpu.memory_space<vmem>>, vector<128x32xf32>
    %cst = arith.constant dense<0.000000e+00> : vector<8x128xf32>
    %2 = tpu.matmul %0, %1, %cst {dimension_numbers = #tpu.dot_dimension_numbers<[1], [1], [0], [0], [0, 0, 1, 0], [], []>} : vector<8x32xf32>, vector<128x32xf32>, vector<8x128xf32> -> vector<8x128xf32>
    %cst_3 = arith.constant dense<0.000000e+00> : vector<128xf32>
    %3 = vector.multi_reduction <add>, %2, %cst_3 [0] : vector<8x128xf32> to vector<128xf32>
    %4 = vector.shape_cast %3 : vector<128xf32> to vector<1x128xf32>
    %5 = arith.mulf %2, %2 : vector<8x128xf32>
    %cst_4 = arith.constant dense<0.000000e+00> : vector<128xf32>
    %6 = vector.multi_reduction <add>, %5, %cst_4 [0] : vector<8x128xf32> to vector<128xf32>
    %7 = vector.shape_cast %6 : vector<128xf32> to vector<1x128xf32>
    %cst_5 = arith.constant 1.250000e-01 : f32
    %8 = vector.broadcast %cst_5 : f32 to vector<1x128xf32>
    %9 = arith.mulf %4, %8 : vector<1x128xf32>
    %cst_6 = arith.constant 1.250000e-01 : f32
    %10 = vector.broadcast %cst_6 : f32 to vector<1x128xf32>
    %11 = arith.mulf %7, %10 : vector<1x128xf32>
    %12 = arith.mulf %9, %9 : vector<1x128xf32>
    %13 = arith.subf %11, %12 : vector<1x128xf32>
    %cst_7 = arith.constant 9.99999974E-6 : f32
    %14 = vector.broadcast %cst_7 : f32 to vector<1x128xf32>
    %15 = arith.addf %13, %14 : vector<1x128xf32>
    %16 = math.rsqrt %15 : vector<1x128xf32>
    %c0_8 = arith.constant 0 : index
    %c0_9 = arith.constant 0 : index
    %17 = vector.load %arg2[%c0_8, %c0_9] : memref<1x128xf32, #tpu.memory_space<vmem>>, vector<1x128xf32>
    %18 = arith.mulf %16, %17 : vector<1x128xf32>
    %c0_10 = arith.constant 0 : index
    %c0_11 = arith.constant 0 : index
    %19 = vector.load %arg3[%c0_10, %c0_11] : memref<1x128xf32, #tpu.memory_space<vmem>>, vector<1x128xf32>
    %20 = arith.mulf %9, %18 : vector<1x128xf32>
    %21 = arith.subf %19, %20 : vector<1x128xf32>
    %22 = vector.broadcast %18 : vector<1x128xf32> to vector<8x128xf32>
    %23 = arith.mulf %2, %22 : vector<8x128xf32>
    %24 = vector.broadcast %21 : vector<1x128xf32> to vector<8x128xf32>
    %25 = arith.addf %23, %24 : vector<8x128xf32>
    %cst_12 = arith.constant 0.000000e+00 : f32
    %26 = vector.broadcast %cst_12 : f32 to vector<8x128xf32>
    %27 = arith.maximumf %25, %26 : vector<8x128xf32>
    %c0_13 = arith.constant 0 : index
    %c0_14 = arith.constant 0 : index
    %28 = vector.load %arg4[%c0_13, %c0_14] : memref<1x128xf32, #tpu.memory_space<vmem>>, vector<1x128xf32>
    %29 = vector.broadcast %28 : vector<1x128xf32> to vector<8x128xf32>
    %30 = arith.mulf %27, %29 : vector<8x128xf32>
    %cst_15 = arith.constant dense<0.000000e+00> : vector<8xf32>
    %31 = vector.multi_reduction <add>, %30, %cst_15 [1] : vector<8x128xf32> to vector<8xf32>
    %32 = vector.shape_cast %31 : vector<8xf32> to vector<8x1xf32>
    %c0_16 = arith.constant 0 : index
    %c0_17 = arith.constant 0 : index
    %33 = vector.load %arg5[%c0_16, %c0_17] : memref<8x1xf32, #tpu.memory_space<vmem>>, vector<8x1xf32>
    tpu.vector_store %arg5[%c0_16, %c0_17], %32 {strides = array<i32>} : memref<8x1xf32, #tpu.memory_space<vmem>>, vector<8x1xf32>,
    return
  }
}

</mosaic_0001>

<llo_original>
// kernel: tpu_custom_call.1
$region0: #{tpu_custom_call.1}
  #allocation0 [shape = 'u32[]', space=smem, size = 0x4, offset = 0x4, fixed_abs, tag = 'smem constant byte address 0x4 - core index']
  #allocation1 [shape = 'u32[72,128]{1,0:T(1,128)}', space=vmem, size = 0x9000, scoped, tag = 'internal scratch']
  %s0 = inlined_call_operand.vmem [shape: f32[8,32], index: 0, kind: input, shape index: {}]
  %s1 = inlined_call_operand.vmem [shape: f32[128,32], index: 1, kind: input, shape index: {}]
  %s2 = inlined_call_operand.vmem [shape: f32[1,128], index: 2, kind: input, shape index: {}]
  %s3 = inlined_call_operand.vmem [shape: f32[1,128], index: 3, kind: input, shape index: {}]
  %s4 = inlined_call_operand.vmem [shape: f32[1,128], index: 4, kind: input, shape index: {}]
  %s5 = inlined_call_operand.vmem [shape: f32[8,1], index: 5, kind: output, shape index: {}]
  %s6 = sld [smem:[#allocation0]]
  $region30: #{tpu_custom_call.1} parent=0
    _
  %s8 = ssub.s32 1, %s6
  %s9 = scalar_select 0, %s8, %s6
  // Predicated region
  $region2: #{tpu_custom_call.1} parent=0 // pred_check
    _
  $region3: #{tpu_custom_call.1} parent=0 // pred_check_branch
    %11 = sbr.rel (0) target = $region5
  $region4: #{tpu_custom_call.1} parent=0 // pred_region
    _
  $region5: #{tpu_custom_call.1} parent=0 // pred_fallthru
    _
  // Predicated region
  $region6: #{tpu_custom_call.1} parent=0 // pred_check
    _
  $region7: #{tpu_custom_call.1} parent=0 // pred_check_branch
    %13 = sbr.rel (0) target = $region9
  $region8: #{tpu_custom_call.1} parent=0 // pred_region
    _
  $region9: #{tpu_custom_call.1} parent=0 // pred_fallthru
    _
  // Predicated region
  $region10: #{tpu_custom_call.1} parent=0 // pred_check
    _
  $region11: #{tpu_custom_call.1} parent=0 // pred_check_branch
    %15 = sbr.rel (0) target = $region13
  $region12: #{tpu_custom_call.1} parent=0 // pred_region
    _
  $region13: #{tpu_custom_call.1} parent=0 // pred_fallthru
    _
  // Predicated region
  $region14: #{tpu_custom_call.1} parent=0 // pred_check
    _
  $region15: #{tpu_custom_call.1} parent=0 // pred_check_branch
    %17 = sbr.rel (0) target = $region17
  $region16: #{tpu_custom_call.1} parent=0 // pred_region
    _
  $region17: #{tpu_custom_call.1} parent=0 // pred_fallthru
    _
  // Predicated region
  $region18: #{tpu_custom_call.1} parent=0 // pred_check
    _
  $region19: #{tpu_custom_call.1} parent=0 // pred_check_branch
    %19 = sbr.rel (0) target = $region21
  $region20: #{tpu_custom_call.1} parent=0 // pred_region
    _
  $region21: #{tpu_custom_call.1} parent=0 // pred_fallthru
    _
  %v20 = vld [vmem:[%s0] sm:$0xff]
  %v21 = vld [vmem:[%s1] sm:$0xff]
  %v22 = vld [vmem:[%s1 + $0x8] sm:$0xff]
  %v23 = vld [vmem:[%s1 + $0x10] sm:$0xff]
  %v24 = vld [vmem:[%s1 + $0x18] sm:$0xff]
  %v25 = vld [vmem:[%s1 + $0x20] sm:$0xff]
  %v26 = vld [vmem:[%s1 + $0x28] sm:$0xff]
  %v27 = vld [vmem:[%s1 + $0x30] sm:$0xff]
  %v28 = vld [vmem:[%s1 + $0x38] sm:$0xff]
  %v29 = vld [vmem:[%s1 + $0x40] sm:$0xff]
  %v30 = vld [vmem:[%s1 + $0x48] sm:$0xff]
  %v31 = vld [vmem:[%s1 + $0x50] sm:$0xff]
  %v32 = vld [vmem:[%s1 + $0x58] sm:$0xff]
  %v33 = vld [vmem:[%s1 + $0x60] sm:$0xff]
  %v34 = vld [vmem:[%s1 + $0x68] sm:$0xff]
  %v35 = vld [vmem:[%s1 + $0x70] sm:$0xff]
  %v36 = vld [vmem:[%s1 + $0x78] sm:$0xff]
  %vm37 = vcmask 261120
  %v39 = vsel %vm37, %v20, 0
  %v42 = vsel %vm37, %v21, 0
  %v45 = vsel %vm37, %v22, 0
  %v48 = vsel %vm37, %v23, 0
  %v51 = vsel %vm37, %v24, 0
  %v54 = vsel %vm37, %v25, 0
  %v57 = vsel %vm37, %v26, 0
  %v60 = vsel %vm37, %v27, 0
  %v63 = vsel %vm37, %v28, 0
  %v66 = vsel %vm37, %v29, 0
  %v69 = vsel %vm37, %v30, 0
  %v72 = vsel %vm37, %v31, 0
  %v75 = vsel %vm37, %v32, 0
  %v78 = vsel %vm37, %v33, 0
  %v81 = vsel %vm37, %v34, 0
  %v84 = vsel %vm37, %v35, 0
  %v87 = vsel %vm37, %v36, 0
  %89 = vmatpush.xpose.msra.mxu0 %v87
  %90 = vmatpush.xpose.msra.mxu0 %v84
  %91 = vmatpush.xpose.msra.mxu0 %v81
  %92 = vmatpush.xpose.msra.mxu0 %v78
  %93 = vmatpush.xpose.msra.mxu0 %v75
  %94 = vmatpush.xpose.msra.mxu0 %v72
  %95 = vmatpush.xpose.msra.mxu0 %v69
  %96 = vmatpush.xpose.msra.mxu0 %v66
  %97 = vmatpush.xpose.msra.mxu0 %v63
  %98 = vmatpush.xpose.msra.mxu0 %v60
  %99 = vmatpush.xpose.msra.mxu0 %v57
  %100 = vmatpush.xpose.msra.mxu0 %v54
  %101 = vmatpush.xpose.msra.mxu0 %v51
  %102 = vmatpush.xpose.msra.mxu0 %v48
  %103 = vmatpush.xpose.msra.mxu0 %v45
  %104 = vmatpush.xpose.msra.mxu0 %v42
  %105 = vmatmul.f32.gmra.mxu0 %v39
  %v106 = vpop.f32.mrf.mxu0
  %v107 = vadd.f32 0.0, %v106
  %108 = vdwg.mxu0
  %v109 = vrot.slane %v107, 4
  %v110 = vadd.f32 %v107, %v109
  %v111 = vrot.slane %v110, 2
  %v112 = vadd.f32 %v110, %v111
  %v113 = vrot.slane %v112, 1
  %v114 = vadd.f32 %v112, %v113
  %v115 = vmul.f32 %v107, %v107
  %v116 = vrot.slane %v115, 4
  %v117 = vadd.f32 %v115, %v116
  %v118 = vrot.slane %v117, 2
  %v119 = vadd.f32 %v117, %v118
  %v120 = vrot.slane %v119, 1
  %v121 = vadd.f32 %v119, %v120
  %v122 = vmul.f32 %v114, 0.125
  %v123 = vmul.f32 %v121, 0.125
  %v124 = vmul.f32 %v122, %v122
  %v125 = vsub.f32 %v123, %v124
  %v126 = vadd.f32 %v125, 1e-05
  %v127 = vrsqrt.pop %v126
  %v128 = vmul.f32 %v127, %v126
  %v129 = vmul.f32 %v128, %v127
  %v130 = vmul.f32 0.5, %v129
  %v131 = vsub.f32 1.5, %v130
  %v132 = vmul.f32 %v127, %v131
  %vm133 = vweird.f32 %v126
  %vm134 = vweird.f32 %v127
  %vm135 = vmor %vm133, %vm134
  %v136 = vsel %vm135, %v127, %v132
  %v137 = vld [vmem:[%s2] sm:$0x1]
  %v138 = vmul.f32 %v136, %v137
  %v139 = vld [vmem:[%s3] sm:$0x1]
  %v140 = vmul.f32 %v122, %v138
  %v141 = vsub.f32 %v139, %v140
  %v142 = vperm.slane %v138, 0
  %v143 = vmul.f32 %v107, %v142
  %v145 = vperm.slane %v141, 0
  %v147 = vadd.f32 %v143, %v145
  %v148 = vmax.f32 %v147, 0.0
  %v149 = vld [vmem:[%s4] sm:$0x1]
  %v151 = vperm.slane %v149, 0
  %v153 = vmul.f32 %v148, %v151
  %154 = vadd.xlane.f32.xlu0 %v153
  %v155 = vpop.xlane.xlu0 %154
  %vm156 = vcmask 7168
  %157 = vst.msk [vmem:[%s5] sm:$0xff] %vm156, %v155
  // Predicated region
  $region22: #{tpu_custom_call.1} parent=0 // pred_check
    _
  $region23: #{tpu_custom_call.1} parent=0 // pred_check_branch
    %159 = sbr.rel (0) target = $region25
  $region24: #{tpu_custom_call.1} parent=0 // pred_region
    _
  $region25: #{tpu_custom_call.1} parent=0 // pred_fallthru
    _
  // Predicated region
  $region26: #{tpu_custom_call.1} parent=0 // pred_check
    _
  $region27: #{tpu_custom_call.1} parent=0 // pred_check_branch
    %161 = sbr.rel (0) target = $region29
  $region28: #{tpu_custom_call.1} parent=0 // pred_region
    _
  $region29: #{tpu_custom_call.1} parent=0 // pred_fallthru
    _

</llo_original>
